<compile_context>
chip_gen: v5e
topology: v5e:2x2
jax: 0.10.0
libtpu: 0.0.40
codegen_flags: <defaults>
</compile_context>

<pallas_src>
import functools
import math

import jax
import jax.numpy as jnp
from jax.experimental import pallas as pl
from jax.experimental.pallas import tpu as pltpu

_NA_PAD = 128                       # lanes per head (action dim padded to one vreg lane width)
_HALF_LOG_2PI = 0.5 * math.log(2.0 * math.pi)


def _round_up(x, m):
    return (x + m - 1) // m * m


def _actor_kernel(x_ref, eps_ref, w1_ref, b1_ref, w2_ref, b2_ref,
                  wh_ref, bh_ref, out_ref, eps_pad_ref, *, n_actions):
    f32 = jnp.float32
    mm_dtype = w1_ref.dtype
    tile_b = x_ref.shape[0]
    na_pad = out_ref.shape[-1]                               # 128

    # Widen the (tile_b, n_actions) noise to a full 128-lane buffer (padded lanes = 0)
    # via a small VMEM scratch; the HBM-side eps stream stays at n_actions lanes.
    eps_pad_ref[...] = jnp.zeros_like(eps_pad_ref)
    eps_pad_ref[:, :n_actions] = eps_ref[...]
    eps = eps_pad_ref[...]

    # feature = Linear -> ReLU -> Linear -> ReLU  (MXU in bf16, f32 accumulate)
    x = x_ref[...].astype(mm_dtype)
    h1 = jnp.dot(x, w1_ref[...], preferred_element_type=f32) + b1_ref[...]
    h1 = jnp.maximum(h1, 0.0)
    h2 = jnp.dot(h1.astype(mm_dtype), w2_ref[...], preferred_element_type=f32) + b2_ref[...]
    h2 = jnp.maximum(h2, 0.0)

    # fused heads: lanes [0, na_pad) = mu, lanes [na_pad, 2*na_pad) = log_std
    heads = jnp.dot(h2.astype(mm_dtype), wh_ref[...], preferred_element_type=f32) + bh_ref[...]
    mu = heads[:, :na_pad]
    log_std = jnp.clip(heads[:, na_pad:], -20.0, 2.0)
    std = jnp.exp(log_std)

    # rsample + tanh squash (padded lanes: mu=0, log_std=0 -> std=1, eps=0 -> action=0)
    z = mu + std * eps
    action = jnp.tanh(z)

    # Normal(mu, std).log_prob(z) - log(1 - a^2 + 1e-7), summed over real action lanes.
    # NOTE: kept in the same (non-stabilized) form as the PyTorch reference for parity;
    # the stable variant would be 2*(log 2 - z - softplus(-2z)).
    log_prob = (-0.5 * eps * eps) - log_std - _HALF_LOG_2PI
    log_prob = log_prob - jnp.log(1.0 - action * action + 1e-07)
    lane = jax.lax.broadcasted_iota(jnp.int32, (tile_b, na_pad), 1)
    log_prob = jnp.where(lane < n_actions, log_prob, 0.0)
    logp = jnp.sum(log_prob, axis=-1, keepdims=True)         # (tile_b, 1)

    # Single lane-dense 128-wide store: lanes [0, n_actions) = action,
    # lane n_actions = logp, remaining lanes = (ignored) zero-padded action.
    out_ref[...] = jnp.where(lane == n_actions, logp, action)


def prepare_params(params, matmul_dtype=jnp.bfloat16):
    """Fuse + lane-pad the two head layers, zero-pad n_hidden to a 128 multiple, and
    cast matmul weights to the MXU dtype.

    `params` holds weights already transposed to (in, out) and biases as (1, out)."""
    n_states, n_hidden = params["w1"].shape
    n_actions = params["w_mu"].shape[1]
    assert n_actions < _NA_PAD, "logp is packed into a padded action lane"
    h_pad = _round_up(n_hidden, 128)

    def pad2(a, rows, cols):
        return jnp.pad(a, ((0, rows - a.shape[0]), (0, cols - a.shape[1])))

    w_heads = jnp.concatenate([pad2(params["w_mu"], h_pad, _NA_PAD),
                               pad2(params["w_ls"], h_pad, _NA_PAD)], axis=1)
    b_heads = jnp.concatenate([pad2(params["b_mu"], 1, _NA_PAD),
                               pad2(params["b_ls"], 1, _NA_PAD)], axis=1)

    return dict(
        w1=pad2(params["w1"], n_states, h_pad).astype(matmul_dtype),
        b1=pad2(params["b1"], 1, h_pad).astype(jnp.float32),
        w2=pad2(params["w2"], h_pad, h_pad).astype(matmul_dtype),
        b2=pad2(params["b2"], 1, h_pad).astype(jnp.float32),
        w_heads=w_heads.astype(matmul_dtype),
        b_heads=b_heads.astype(jnp.float32),
        n_states=n_states, n_hidden=n_hidden, n_hidden_pad=h_pad, n_actions=n_actions,
    )


def _choose_tile_b(batch, tile_b_max=512):
    """Batch tile: multiple of 16 (bf16 sublane packing); >= 2 tiles whenever
    batch > 32 so ("parallel",) grid semantics shard work across v7x's two cores."""
    b16 = _round_up(batch, 16)
    if b16 <= 32:
        return b16
    half = _round_up((b16 + 1) // 2, 16)
    return min(tile_b_max, half)


def actor_forward(state, prep, eps, *, tile_b_max=512):
    """state: (B, n_states) f32; eps: (B, n_actions) f32 standard-normal noise.

    Returns (action (B, n_actions) f32, log_prob (B, 1) f32)."""
    B = state.shape[0]
    n_states = prep["n_states"]
    n_actions = prep["n_actions"]
    h_pad = prep["n_hidden_pad"]
    head_w = 2 * _NA_PAD
    out_w = _NA_PAD

    tile_b = _choose_tile_b(B, tile_b_max)
    b_pad = _round_up(B, tile_b)
    n_tiles = b_pad // tile_b

    # f32 inputs straight from HBM (cast to bf16 inside the kernel); only pad the
    # batch when B is not already a tile multiple.
    x = state.astype(jnp.float32)
    eps_in = eps.astype(jnp.float32)
    if b_pad != B:
        x = jnp.pad(x, ((0, b_pad - B), (0, 0)))
        eps_in = jnp.pad(eps_in, ((0, b_pad - B), (0, 0)))

    mm_dtype = prep["w1"].dtype
    mm_bytes = jnp.dtype(mm_dtype).itemsize
    weight_bytes = ((n_states * h_pad + h_pad * h_pad + h_pad * head_w) * mm_bytes
                    + (2 * h_pad + head_w) * 4)

    cost = pl.CostEstimate(
        flops=2 * b_pad * (n_states * h_pad + h_pad * h_pad + h_pad * head_w),
        transcendentals=3 * b_pad * _NA_PAD,
        bytes_accessed=(b_pad * n_states * 4           # state (f32)
                        + b_pad * n_actions * 4        # eps (true lane width)
                        + weight_bytes                 # weights + biases
                        + b_pad * out_w * 4))          # output slab

    # Per-tile live set: double-buffered x/eps/out tiles, double-buffered resident
    # weights, the eps scratch, and f32 activation temps.  Explicit limit keeps the
    # tiling portable across v5e (16 MiB) / v6e (32 MiB) / v7x (32 MiB) defaults.
    live_bytes = (2 * weight_bytes
                  + 2 * tile_b * (n_states + n_actions + out_w) * 4
                  + tile_b * _NA_PAD * 4                       # eps scratch
                  + tile_b * (2 * h_pad + 8 * _NA_PAD) * 4)    # f32 temps
    vmem_limit = int(min(64 * 2**20, max(32 * 2**20, 2 * live_bytes)))

    def batch_spec(shape):
        return pl.BlockSpec(shape, lambda i: (i, 0))

    def resident_spec(shape):
        # Grid-invariant (VMEM-resident) weights / biases.
        return pl.BlockSpec(shape, lambda i: (0, 0))

    slab = pl.pallas_call(
        functools.partial(_actor_kernel, n_actions=n_actions),
        out_shape=jax.ShapeDtypeStruct((b_pad, out_w), jnp.float32),
        grid_spec=pltpu.PrefetchScalarGridSpec(
            num_scalar_prefetch=0,
            grid=(n_tiles,),
            in_specs=[
                batch_spec((tile_b, n_states)),          # state tile (f32, cast in-kernel)
                batch_spec((tile_b, n_actions)),         # eps tile (unpadded lanes)
                resident_spec((n_states, h_pad)),        # w1
                resident_spec((1, h_pad)),               # b1
                resident_spec((h_pad, h_pad)),           # w2
                resident_spec((1, h_pad)),               # b2
                resident_spec((h_pad, head_w)),          # fused head weight
                resident_spec((1, head_w)),              # fused head bias
            ],
            out_specs=batch_spec((tile_b, out_w)),
            scratch_shapes=[pltpu.VMEM((tile_b, _NA_PAD), jnp.float32)],
        ),
        compiler_params=pltpu.CompilerParams(
            dimension_semantics=("parallel",),
            vmem_limit_bytes=vmem_limit),
        cost_estimate=cost,
    )(x, eps_in,
      prep["w1"], prep["b1"], prep["w2"], prep["b2"],
      prep["w_heads"], prep["b_heads"])

    action = slab[:B, :n_actions]
    log_prob = slab[:B, n_actions:n_actions + 1]
    return action, log_prob


def init_params(key, n_states, n_actions, n_hidden):
    """PyTorch-Linear-style init (uniform +/- 1/sqrt(fan_in)); weights stored (in, out)."""
    ks = jax.random.split(key, 8)

    def lin(kw, kb, fan_in, fan_out):
        bound = 1.0 / math.sqrt(fan_in)
        w = jax.random.uniform(kw, (fan_in, fan_out), jnp.float32, -bound, bound)
        b = jax.random.uniform(kb, (1, fan_out), jnp.float32, -bound, bound)
        return w, b

    w1, b1 = lin(ks[0], ks[1], n_states, n_hidden)
    w2, b2 = lin(ks[2], ks[3], n_hidden, n_hidden)
    w_ls, b_ls = lin(ks[4], ks[5], n_hidden, n_actions)
    w_mu, b_mu = lin(ks[6], ks[7], n_hidden, n_actions)
    return dict(w1=w1, b1=b1, w2=w2, b2=b2,
                w_mu=w_mu, b_mu=b_mu, w_ls=w_ls, b_ls=b_ls)


if __name__ == "__main__":
    B, n_states, n_actions, n_hidden = 8, 16, 4, 32

    key = jax.random.PRNGKey(0)
    k_param, k_state, k_eps = jax.random.split(key, 3)

    params = init_params(k_param, n_states, n_actions, n_hidden)
    prep = prepare_params(params)                      # fuse heads, pad hidden, cast to bf16
    state = jax.random.normal(k_state, (B, n_states), jnp.float32)
    eps = jax.random.normal(k_eps, (B, n_actions), jnp.float32)   # rsample noise

    action, log_prob = actor_forward(state, prep, eps)
    jax.block_until_ready((action, log_prob))

    # Pure-JAX reference using the same (bf16-cast, padded) weights and the same noise.
    f32 = jnp.float32
    mm = prep["w1"].dtype
    h1 = jax.nn.relu(jnp.dot(state.astype(mm), prep["w1"], preferred_element_type=f32) + prep["b1"])
    h2 = jax.nn.relu(jnp.dot(h1.astype(mm), prep["w2"], preferred_element_type=f32) + prep["b2"])
    heads = jnp.dot(h2.astype(mm), prep["w_heads"], preferred_element_type=f32) + prep["b_heads"]
    mu_r = heads[:, :n_actions]
    log_std_r = jnp.clip(heads[:, _NA_PAD:_NA_PAD + n_actions], -20.0, 2.0)
    z_r = mu_r + jnp.exp(log_std_r) * eps
    action_r = jnp.tanh(z_r)
    logp_r = (-0.5 * eps * eps - log_std_r - _HALF_LOG_2PI
              - jnp.log(1.0 - action_r * action_r + 1e-07)).sum(-1, keepdims=True)

    assert action.shape == (B, n_actions)
    assert log_prob.shape == (B, 1)
    assert bool(jnp.all(jnp.isfinite(action)))
    assert bool(jnp.all(jnp.isfinite(log_prob)))
    assert bool(jnp.all(jnp.abs(action) <= 1.0))
    assert bool(jnp.allclose(action, action_r, atol=2e-2, rtol=2e-2))
    assert bool(jnp.allclose(log_prob, logp_r, atol=5e-2, rtol=5e-2))
    print("KERNEL_OK")
</pallas_src>

<mosaic_0001>
module attributes {stable_mosaic.version = 11 : i64} {
  func.func @_actor_kernel(%arg0: i32, %arg1: memref<16x16xf32, #tpu.memory_space<vmem>>, %arg2: memref<16x4xf32, #tpu.memory_space<vmem>>, %arg3: memref<16x128xbf16, #tpu.memory_space<vmem>>, %arg4: memref<1x128xf32, #tpu.memory_space<vmem>>, %arg5: memref<128x128xbf16, #tpu.memory_space<vmem>>, %arg6: memref<1x128xf32, #tpu.memory_space<vmem>>, %arg7: memref<128x256xbf16, #tpu.memory_space<vmem>>, %arg8: memref<1x256xf32, #tpu.memory_space<vmem>>, %arg9: memref<16x128xf32, #tpu.memory_space<vmem>>, %arg10: memref<16x128xf32, #tpu.memory_space<vmem>>) attributes {dimension_semantics = [#tpu.dimension_semantics<parallel>], iteration_bounds = array<i64: 1>, scalar_prefetch = 0 : i64, scratch_operands = 1 : i64, tpu.core_type = #tpu.core_type<tc>, window_params = [{transform_indices = @transform_0, window_bounds = array<i64: 16, 16>}, {transform_indices = @transform_1, window_bounds = array<i64: 16, 4>}, {pipeline_mode = #tpu.pipeline_mode<synchronous>, transform_indices = @transform_2, window_bounds = array<i64: 16, 128>}, {pipeline_mode = #tpu.pipeline_mode<synchronous>, transform_indices = @transform_3, window_bounds = array<i64: 1, 128>}, {pipeline_mode = #tpu.pipeline_mode<synchronous>, transform_indices = @transform_4, window_bounds = array<i64: 128, 128>}, {pipeline_mode = #tpu.pipeline_mode<synchronous>, transform_indices = @transform_5, window_bounds = array<i64: 1, 128>}, {pipeline_mode = #tpu.pipeline_mode<synchronous>, transform_indices = @transform_6, window_bounds = array<i64: 128, 256>}, {pipeline_mode = #tpu.pipeline_mode<synchronous>, transform_indices = @transform_7, window_bounds = array<i64: 1, 256>}, {transform_indices = @transform_8, window_bounds = array<i64: 16, 128>}]} {
    %cst = arith.constant 0.000000e+00 : f32
    %0 = vector.broadcast %cst : f32 to vector<16x128xf32>
    %c0 = arith.constant 0 : index
    %c0_0 = arith.constant 0 : index
    %1 = vector.load %arg10[%c0, %c0_0] : memref<16x128xf32, #tpu.memory_space<vmem>>, vector<16x128xf32>
    tpu.vector_store %arg10[%c0, %c0_0], %0 {strides = array<i32>} : memref<16x128xf32, #tpu.memory_space<vmem>>, vector<16x128xf32>,
    %c0_1 = arith.constant 0 : index
    %c0_2 = arith.constant 0 : index
    %2 = vector.load %arg2[%c0_1, %c0_2] : memref<16x4xf32, #tpu.memory_space<vmem>>, vector<16x4xf32>
    %c0_3 = arith.constant 0 : index
    %c0_4 = arith.constant 0 : index
    %3 = vector.load %arg10[%c0_3, %c0_4] : memref<16x128xf32, #tpu.memory_space<vmem>>, vector<16x4xf32>
    tpu.vector_store %arg10[%c0_3, %c0_4], %2 {strides = array<i32>} : memref<16x128xf32, #tpu.memory_space<vmem>>, vector<16x4xf32>,
    %c0_5 = arith.constant 0 : index
    %c0_6 = arith.constant 0 : index
    %4 = vector.load %arg10[%c0_5, %c0_6] : memref<16x128xf32, #tpu.memory_space<vmem>>, vector<16x128xf32>
    %c0_7 = arith.constant 0 : index
    %c0_8 = arith.constant 0 : index
    %5 = vector.load %arg1[%c0_7, %c0_8] : memref<16x16xf32, #tpu.memory_space<vmem>>, vector<16x16xf32>
    %6 = arith.truncf %5 : vector<16x16xf32> to vector<16x16xbf16>
    %c0_9 = arith.constant 0 : index
    %c0_10 = arith.constant 0 : index
    %7 = vector.load %arg3[%c0_9, %c0_10] : memref<16x128xbf16, #tpu.memory_space<vmem>>, vector<16x128xbf16>
    %cst_11 = arith.constant dense<0.000000e+00> : vector<16x128xf32>
    %8 = tpu.matmul %6, %7, %cst_11 {dimension_numbers = #tpu.dot_dimension_numbers<[1], [0], [0], [1], [0, 0, 1, 1], [], []>} : vector<16x16xbf16>, vector<16x128xbf16>, vector<16x128xf32> -> vector<16x128xf32>
    %c0_12 = arith.constant 0 : index
    %c0_13 = arith.constant 0 : index
    %9 = vector.load %arg4[%c0_12, %c0_13] : memref<1x128xf32, #tpu.memory_space<vmem>>, vector<1x128xf32>
    %10 = vector.broadcast %9 : vector<1x128xf32> to vector<16x128xf32>
    %11 = arith.addf %8, %10 : vector<16x128xf32>
    %cst_14 = arith.constant 0.000000e+00 : f32
    %12 = vector.broadcast %cst_14 : f32 to vector<16x128xf32>
    %13 = arith.maximumf %11, %12 : vector<16x128xf32>
    %14 = arith.truncf %13 : vector<16x128xf32> to vector<16x128xbf16>
    %c0_15 = arith.constant 0 : index
    %c0_16 = arith.constant 0 : index
    %15 = vector.load %arg5[%c0_15, %c0_16] : memref<128x128xbf16, #tpu.memory_space<vmem>>, vector<128x128xbf16>
    %cst_17 = arith.constant dense<0.000000e+00> : vector<16x128xf32>
    %16 = tpu.matmul %14, %15, %cst_17 {dimension_numbers = #tpu.dot_dimension_numbers<[1], [0], [0], [1], [0, 0, 1, 1], [], []>} : vector<16x128xbf16>, vector<128x128xbf16>, vector<16x128xf32> -> vector<16x128xf32>
    %c0_18 = arith.constant 0 : index
    %c0_19 = arith.constant 0 : index
    %17 = vector.load %arg6[%c0_18, %c0_19] : memref<1x128xf32, #tpu.memory_space<vmem>>, vector<1x128xf32>
    %18 = vector.broadcast %17 : vector<1x128xf32> to vector<16x128xf32>
    %19 = arith.addf %16, %18 : vector<16x128xf32>
    %cst_20 = arith.constant 0.000000e+00 : f32
    %20 = vector.broadcast %cst_20 : f32 to vector<16x128xf32>
    %21 = arith.maximumf %19, %20 : vector<16x128xf32>
    %22 = arith.truncf %21 : vector<16x128xf32> to vector<16x128xbf16>
    %c0_21 = arith.constant 0 : index
    %c0_22 = arith.constant 0 : index
    %23 = vector.load %arg7[%c0_21, %c0_22] : memref<128x256xbf16, #tpu.memory_space<vmem>>, vector<128x256xbf16>
    %cst_23 = arith.constant dense<0.000000e+00> : vector<16x256xf32>
    %24 = tpu.matmul %22, %23, %cst_23 {dimension_numbers = #tpu.dot_dimension_numbers<[1], [0], [0], [1], [0, 0, 1, 1], [], []>} : vector<16x128xbf16>, vector<128x256xbf16>, vector<16x256xf32> -> vector<16x256xf32>
    %c0_24 = arith.constant 0 : index
    %c0_25 = arith.constant 0 : index
    %25 = vector.load %arg8[%c0_24, %c0_25] : memref<1x256xf32, #tpu.memory_space<vmem>>, vector<1x256xf32>
    %26 = vector.broadcast %25 : vector<1x256xf32> to vector<16x256xf32>
    %27 = arith.addf %24, %26 : vector<16x256xf32>
    %28 = vector.extract_strided_slice %27 {offsets = [0, 0], sizes = [16, 128], strides = [1, 1]} : vector<16x256xf32> to vector<16x128xf32>
    %29 = vector.extract_strided_slice %27 {offsets = [0, 128], sizes = [16, 128], strides = [1, 1]} : vector<16x256xf32> to vector<16x128xf32>
    %cst_26 = arith.constant -2.000000e+01 : f32
    %cst_27 = arith.constant 2.000000e+00 : f32
    %30 = vector.broadcast %cst_26 : f32 to vector<16x128xf32>
    %31 = arith.maximumf %30, %29 : vector<16x128xf32>
    %32 = vector.broadcast %cst_27 : f32 to vector<16x128xf32>
    %33 = arith.minimumf %32, %31 : vector<16x128xf32>
    %34 = math.exp %33 : vector<16x128xf32>
    %35 = arith.mulf %34, %4 : vector<16x128xf32>
    %36 = arith.addf %28, %35 : vector<16x128xf32>
    %37 = math.tanh %36 : vector<16x128xf32>
    %cst_28 = arith.constant -5.000000e-01 : f32
    %38 = vector.broadcast %cst_28 : f32 to vector<16x128xf32>
    %39 = arith.mulf %38, %4 : vector<16x128xf32>
    %40 = arith.mulf %39, %4 : vector<16x128xf32>
    %41 = arith.subf %40, %33 : vector<16x128xf32>
    %cst_29 = arith.constant 0.918938517 : f32
    %42 = vector.broadcast %cst_29 : f32 to vector<16x128xf32>
    %43 = arith.subf %41, %42 : vector<16x128xf32>
    %44 = arith.mulf %37, %37 : vector<16x128xf32>
    %cst_30 = arith.constant 1.000000e+00 : f32
    %45 = vector.broadcast %cst_30 : f32 to vector<16x128xf32>
    %46 = arith.subf %45, %44 : vector<16x128xf32>
    %cst_31 = arith.constant 1.000000e-07 : f32
    %47 = vector.broadcast %cst_31 : f32 to vector<16x128xf32>
    %48 = arith.addf %46, %47 : vector<16x128xf32>
    %49 = math.log %48 : vector<16x128xf32>
    %50 = arith.subf %43, %49 : vector<16x128xf32>
    %51 = tpu.iota {dimensions = array<i32: 1>} : vector<16x128xi32>
    %c4_i32 = arith.constant 4 : i32
    %52 = vector.broadcast %c4_i32 : i32 to vector<16x128xi32>
    %53 = arith.cmpi slt, %51, %52 : vector<16x128xi32>
    %cst_32 = arith.constant 0.000000e+00 : f32
    %54 = vector.broadcast %cst_32 : f32 to vector<16x128xf32>
    %55 = arith.select %53, %50, %54 : vector<16x128xi1>, vector<16x128xf32>
    %cst_33 = arith.constant dense<0.000000e+00> : vector<16xf32>
    %56 = vector.multi_reduction <add>, %55, %cst_33 [1] : vector<16x128xf32> to vector<16xf32>
    %57 = vector.shape_cast %56 : vector<16xf32> to vector<16x1xf32>
    %c4_i32_34 = arith.constant 4 : i32
    %58 = vector.broadcast %c4_i32_34 : i32 to vector<16x128xi32>
    %59 = arith.cmpi eq, %51, %58 : vector<16x128xi32>
    %60 = vector.shape_cast %57 : vector<16x1xf32> to vector<16x1xf32>
    %61 = vector.broadcast %60 : vector<16x1xf32> to vector<16x128xf32>
    %62 = arith.select %59, %61, %37 : vector<16x128xi1>, vector<16x128xf32>
    %c0_35 = arith.constant 0 : index
    %c0_36 = arith.constant 0 : index
    %63 = vector.load %arg9[%c0_35, %c0_36] : memref<16x128xf32, #tpu.memory_space<vmem>>, vector<16x128xf32>
    tpu.vector_store %arg9[%c0_35, %c0_36], %62 {strides = array<i32>} : memref<16x128xf32, #tpu.memory_space<vmem>>, vector<16x128xf32>,
    return
  }
  func.func @transform_0(%arg0: i32) -> (i32, i32) {
    %c0_i32 = arith.constant 0 : i32
    %c0_i32_0 = arith.constant 0 : i32
    return %arg0, %c0_i32 : i32, i32
  }
  func.func @transform_1(%arg0: i32) -> (i32, i32) {
    %c0_i32 = arith.constant 0 : i32
    %c0_i32_0 = arith.constant 0 : i32
    return %arg0, %c0_i32 : i32, i32
  }
  func.func @transform_2(%arg0: i32) -> (i32, i32) {
    %c0_i32 = arith.constant 0 : i32
    %c0_i32_0 = arith.constant 0 : i32
    %c0_i32_1 = arith.constant 0 : i32
    return %c0_i32, %c0_i32_0 : i32, i32
  }
  func.func @transform_3(%arg0: i32) -> (i32, i32) {
    %c0_i32 = arith.constant 0 : i32
    %c0_i32_0 = arith.constant 0 : i32
    %c0_i32_1 = arith.constant 0 : i32
    return %c0_i32, %c0_i32_0 : i32, i32
  }
  func.func @transform_4(%arg0: i32) -> (i32, i32) {
    %c0_i32 = arith.constant 0 : i32
    %c0_i32_0 = arith.constant 0 : i32
    %c0_i32_1 = arith.constant 0 : i32
    return %c0_i32, %c0_i32_0 : i32, i32
  }
  func.func @transform_5(%arg0: i32) -> (i32, i32) {
    %c0_i32 = arith.constant 0 : i32
    %c0_i32_0 = arith.constant 0 : i32
    %c0_i32_1 = arith.constant 0 : i32
    return %c0_i32, %c0_i32_0 : i32, i32
  }
  func.func @transform_6(%arg0: i32) -> (i32, i32) {
    %c0_i32 = arith.constant 0 : i32
    %c0_i32_0 = arith.constant 0 : i32
    %c0_i32_1 = arith.constant 0 : i32
    return %c0_i32, %c0_i32_0 : i32, i32
  }
  func.func @transform_7(%arg0: i32) -> (i32, i32) {
    %c0_i32 = arith.constant 0 : i32
    %c0_i32_0 = arith.constant 0 : i32
    %c0_i32_1 = arith.constant 0 : i32
    return %c0_i32, %c0_i32_0 : i32, i32
  }
  func.func @transform_8(%arg0: i32) -> (i32, i32) {
    %c0_i32 = arith.constant 0 : i32
    %c0_i32_0 = arith.constant 0 : i32
    return %arg0, %c0_i32 : i32, i32
  }
}

</mosaic_0001>

<llo_original>
// kernel: tpu_custom_call.1
$region0: #{tpu_custom_call.1}
  #allocation0 [shape = 'u32[]', space=smem, size = 0x4, offset = 0x4, fixed_abs, tag = 'smem constant byte address 0x4 - core index']
  #allocation1 [shape = 'u32[72,128]{1,0:T(1,128)}', space=vmem, size = 0x9000, scoped, tag = 'internal scratch']
  #allocation2 [shape = 'f32[16,128]{1,0:T(8,128)}', space=vmem, size = 0x2000, scoped, tag = 'scratch operand']
  %s0 = inlined_call_operand.vmem [shape: f32[16,16], index: 0, kind: input, shape index: {}]
  %s1 = inlined_call_operand.vmem [shape: f32[16,4], index: 1, kind: input, shape index: {}]
  %s2 = inlined_call_operand.hbm [shape: bf16[16,128], index: 2, kind: input, shape index: {}]
  %s3 = inlined_call_operand.vmem [shape: f32[1,128], index: 3, kind: input, shape index: {}]
  %s4 = inlined_call_operand.hbm [shape: bf16[128,128], index: 4, kind: input, shape index: {}]
  %s5 = inlined_call_operand.vmem [shape: f32[1,128], index: 5, kind: input, shape index: {}]
  %s6 = inlined_call_operand.hbm [shape: bf16[128,256], index: 6, kind: input, shape index: {}]
  %s7 = inlined_call_operand.vmem [shape: f32[1,256], index: 7, kind: input, shape index: {}]
  %s8 = inlined_call_operand.hbm [shape: f32[16,128], index: 8, kind: output, shape index: {}]
  %s9 = sld [smem:[#allocation0]]
  $region54: #{tpu_custom_call.1} parent=0
    _
  %s11 = ssub.s32 1, %s9
  %s12 = scalar_select 0, %s11, %s9
  $region1: #{tpu_custom_call.1} parent=0
    #allocation3 [shape = 'u8[4096]{0}', space=vmem, size = 0x1000, scoped, tag = 'input window, operand 2, single buffered']
    #allocation4 [shape = 's32[1]{0}', space=sflag, size = 0x4, scoped, tag = 'scoped memory for tpu_custom_call.1']
    #allocation5 [shape = 's32[1]{0}', space=sflag, size = 0x4, scoped, tag = 'scoped memory for tpu_custom_call.1']
    #allocation6 [shape = 'u8[32768]{0}', space=vmem, size = 0x8000, scoped, tag = 'input window, operand 4, single buffered']
    #allocation7 [shape = 's32[1]{0}', space=sflag, size = 0x4, scoped, tag = 'scoped memory for tpu_custom_call.1']
    #allocation8 [shape = 'u8[65536]{0}', space=vmem, size = 0x10000, scoped, tag = 'input window, operand 6, single buffered']
    #allocation9 [shape = 'u8[8192]{0}', space=vmem, size = 0x2000, scoped, tag = 'output window, operand 0, single buffered']
    %13 = vsyncpa [#allocation4], 0
    %14 = vsyncpa [#allocation7], 0
    %15 = vsyncpa [#allocation5], 0
    // Predicated region
    $region2: #{tpu_custom_call.1} parent=1 // pred_check
      _
    $region3: #{tpu_custom_call.1} parent=1 // pred_check_branch
      %17 = sbr.rel (0) target = $region5
    $region4: #{tpu_custom_call.1} parent=1 // pred_region
      _
    $region5: #{tpu_custom_call.1} parent=1 // pred_fallthru
      _
    // Predicated region
    $region6: #{tpu_custom_call.1} parent=1 // pred_check
      _
    $region7: #{tpu_custom_call.1} parent=1 // pred_check_branch
      %19 = sbr.rel (0) target = $region9
    $region8: #{tpu_custom_call.1} parent=1 // pred_region
      _
    $region9: #{tpu_custom_call.1} parent=1 // pred_fallthru
      _
    // Predicated region
    $region10: #{tpu_custom_call.1} parent=1 // pred_check
      _
    $region11: #{tpu_custom_call.1} parent=1 // pred_check_branch
      %21 = sbr.rel (0) target = $region13
    $region12: #{tpu_custom_call.1} parent=1 // pred_region
      %23 = vsyncadd [#allocation4], 0
      %s24 = sshll.u32 %s2, 4
      %s25 = int_to_ptr.hbm [resolvable:$true] %s24
      %s26 = sshll.u32 [#allocation3], 4
      %s27 = int_to_ptr.vmem [resolvable:$true] %s26
      %32 = dma.hbm_to_vmem [thread:$0]  %s25, 128, %s27, [#allocation4], 64, 64, 4
    $region13: #{tpu_custom_call.1} parent=1 // pred_fallthru
      _
    // Predicated region
    $region14: #{tpu_custom_call.1} parent=1 // pred_check
      _
    $region15: #{tpu_custom_call.1} parent=1 // pred_check_branch
      %34 = sbr.rel (0) target = $region17
    $region16: #{tpu_custom_call.1} parent=1 // pred_region
      _
    $region17: #{tpu_custom_call.1} parent=1 // pred_fallthru
      _
    // Predicated region
    $region18: #{tpu_custom_call.1} parent=1 // pred_check
      _
    $region19: #{tpu_custom_call.1} parent=1 // pred_check_branch
      %36 = sbr.rel (0) target = $region21
    $region20: #{tpu_custom_call.1} parent=1 // pred_region
      %38 = vsyncadd [#allocation7], 0
      %s39 = sshll.u32 %s4, 4
      %s40 = int_to_ptr.hbm [resolvable:$true] %s39
      %s41 = sshll.u32 [#allocation6], 4
      %s42 = int_to_ptr.vmem [resolvable:$true] %s41
      %47 = dma.hbm_to_vmem [thread:$0]  %s40, 1024, %s42, [#allocation7], 64, 64, 4
    $region21: #{tpu_custom_call.1} parent=1 // pred_fallthru
      _
    // Predicated region
    $region22: #{tpu_custom_call.1} parent=1 // pred_check
      _
    $region23: #{tpu_custom_call.1} parent=1 // pred_check_branch
      %49 = sbr.rel (0) target = $region25
    $region24: #{tpu_custom_call.1} parent=1 // pred_region
      _
    $region25: #{tpu_custom_call.1} parent=1 // pred_fallthru
      _
    // Predicated region
    $region26: #{tpu_custom_call.1} parent=1 // pred_check
      _
    $region27: #{tpu_custom_call.1} parent=1 // pred_check_branch
      %51 = sbr.rel (0) target = $region29
    $region28: #{tpu_custom_call.1} parent=1 // pred_region
      %53 = vsyncadd [#allocation7], 0
      %s54 = sshll.u32 %s6, 4
      %s55 = int_to_ptr.hbm [resolvable:$true] %s54
      %s56 = sshll.u32 [#allocation8], 4
      %s57 = int_to_ptr.vmem [resolvable:$true] %s56
      %62 = dma.hbm_to_vmem [thread:$0]  %s55, 2048, %s57, [#allocation7], 128, 128, 8
    $region29: #{tpu_custom_call.1} parent=1 // pred_fallthru
      _
    // Predicated region
    $region30: #{tpu_custom_call.1} parent=1 // pred_check
      _
    $region31: #{tpu_custom_call.1} parent=1 // pred_check_branch
      %64 = sbr.rel (0) target = $region33
    $region32: #{tpu_custom_call.1} parent=1 // pred_region
      _
    $region33: #{tpu_custom_call.1} parent=1 // pred_fallthru
      _
    // Predicated region
    $region34: #{tpu_custom_call.1} parent=1 // pred_check
      _
    $region35: #{tpu_custom_call.1} parent=1 // pred_check_branch
      %66 = sbr.rel (0) target = $region37
    $region36: #{tpu_custom_call.1} parent=1 // pred_region
      %68 = dma.done [#allocation4], 128
    $region37: #{tpu_custom_call.1} parent=1 // pred_fallthru
      _
    // Predicated region
    $region38: #{tpu_custom_call.1} parent=1 // pred_check
      _
    $region39: #{tpu_custom_call.1} parent=1 // pred_check_branch
      %70 = sbr.rel (0) target = $region41
    $region40: #{tpu_custom_call.1} parent=1 // pred_region
      %72 = dma.done [#allocation7], 1024
    $region41: #{tpu_custom_call.1} parent=1 // pred_fallthru
      _
    // Predicated region
    $region42: #{tpu_custom_call.1} parent=1 // pred_check
      _
    $region43: #{tpu_custom_call.1} parent=1 // pred_check_branch
      %74 = sbr.rel (0) target = $region45
    $region44: #{tpu_custom_call.1} parent=1 // pred_region
      %76 = dma.done [#allocation7], 2048
    $region45: #{tpu_custom_call.1} parent=1 // pred_fallthru
      _
    %78 = vst [vmem:[#allocation2] sm:$0xff] 0.0
    %79 = vst [vmem:[#allocation2 + $0x8] sm:$0xff] 0.0
    %v80 = vld [vmem:[%s1] sm:$0xff]
    %v81 = vld [vmem:[%s1 + $0x8] sm:$0xff]
    %vm82 = vcmask 31744
    %83 = vst.msk [vmem:[#allocation2] sm:$0xff] %vm82, %v80
    %84 = vst.msk [vmem:[#allocation2 + $0x8] sm:$0xff] %vm82, %v81
    %v85 = vld [vmem:[#allocation2] sm:$0xff]
    %v86 = vld [vmem:[#allocation2 + $0x8] sm:$0xff]
    %v87 = vld [vmem:[%s0] sm:$0xff]
    %v88 = vld [vmem:[%s0 + $0x8] sm:$0xff]
    %v89 = vpack.c.bf16 %v88, %v87
    %v90 = vld [vmem:[#allocation3] sm:$0xf]
    %v91 = vld [vmem:[#allocation3 + $0x4] sm:$0xf]
    %v92 = vld [vmem:[%s3] sm:$0x1]
    %v94 = vperm.slane %v92, 0
    %v98 = vunpack.c.l.b16 %v90
    %v99 = vunpack.c.l.b16 %v91
    %v100 = vpack.c.b16 %v99, %v98
    %vm102 = vcmask 130048
    %v104 = vsel %vm102, %v89, 0
    %106 = vmatpush.bf16.msra.mxu0 0
    %107 = vmatpush.bf16.msra.mxu0 0
    %108 = vmatpush.bf16.msra.mxu0 0
    %109 = vmatpush.bf16.msra.mxu0 0
    %110 = vmatpush.bf16.msra.mxu0 0
    %111 = vmatpush.bf16.msra.mxu0 0
    %112 = vmatpush.bf16.msra.mxu0 0
    %113 = vmatpush.bf16.msra.mxu0 %v100
    %114 = vmatmul.bf16.gmra.mxu0 %v104
    %v115 = vpop.f32.mrf.mxu0
    %v116 = vadd.f32 %v94, %v115
    %v117 = vpop.f32.mrf.mxu0
    %v118 = vadd.f32 %v94, %v117
    %119 = vdwg.mxu0
    %v120 = vmax.f32 %v116, 0.0
    %v121 = vmax.f32 %v118, 0.0
    %v122 = vpack.c.bf16 %v121, %v120
    %v123 = vld [vmem:[#allocation6] sm:$0xf]
    %v124 = vld [vmem:[#allocation6 + $0x4] sm:$0xf]
    %v125 = vld [vmem:[#allocation6 + $0x8] sm:$0xf]
    %v126 = vld [vmem:[#allocation6 + $0xc] sm:$0xf]
    %v127 = vld [vmem:[#allocation6 + $0x10] sm:$0xf]
    %v128 = vld [vmem:[#allocation6 + $0x14] sm:$0xf]
    %v129 = vld [vmem:[#allocation6 + $0x18] sm:$0xf]
    %v130 = vld [vmem:[#allocation6 + $0x1c] sm:$0xf]
    %v131 = vld [vmem:[#allocation6 + $0x20] sm:$0xf]
    %v132 = vld [vmem:[#allocation6 + $0x24] sm:$0xf]
    %v133 = vld [vmem:[#allocation6 + $0x28] sm:$0xf]
    %v134 = vld [vmem:[#allocation6 + $0x2c] sm:$0xf]
    %v135 = vld [vmem:[#allocation6 + $0x30] sm:$0xf]
    %v136 = vld [vmem:[#allocation6 + $0x34] sm:$0xf]
    %v137 = vld [vmem:[#allocation6 + $0x38] sm:$0xf]
    %v138 = vld [vmem:[#allocation6 + $0x3c] sm:$0xf]
    %v139 = vld [vmem:[%s5] sm:$0x1]
    %v141 = vperm.slane %v139, 0
    %v159 = vunpack.c.l.b16 %v123
    %v160 = vunpack.c.l.b16 %v124
    %v161 = vunpack.c.l.b16 %v125
    %v162 = vunpack.c.l.b16 %v126
    %v163 = vunpack.c.l.b16 %v127
    %v164 = vunpack.c.l.b16 %v128
    %v165 = vunpack.c.l.b16 %v129
    %v166 = vunpack.c.l.b16 %v130
    %v167 = vunpack.c.l.b16 %v131
    %v168 = vunpack.c.l.b16 %v132
    %v169 = vunpack.c.l.b16 %v133
    %v170 = vunpack.c.l.b16 %v134
    %v171 = vunpack.c.l.b16 %v135
    %v172 = vunpack.c.l.b16 %v136
    %v173 = vunpack.c.l.b16 %v137
    %v174 = vunpack.c.l.b16 %v138
    %v175 = vpack.c.b16 %v160, %v159
    %v176 = vpack.c.b16 %v162, %v161
    %v177 = vpack.c.b16 %v164, %v163
    %v178 = vpack.c.b16 %v166, %v165
    %v179 = vpack.c.b16 %v168, %v167
    %v180 = vpack.c.b16 %v170, %v169
    %v181 = vpack.c.b16 %v172, %v171
    %v182 = vpack.c.b16 %v174, %v173
    %191 = vmatpush.bf16.msra.mxu0 %v182
    %192 = vmatpush.bf16.msra.mxu0 %v181
    %193 = vmatpush.bf16.msra.mxu0 %v180
    %194 = vmatpush.bf16.msra.mxu0 %v179
    %195 = vmatpush.bf16.msra.mxu0 %v178
    %196 = vmatpush.bf16.msra.mxu0 %v177
    %197 = vmatpush.bf16.msra.mxu0 %v176
    %198 = vmatpush.bf16.msra.mxu0 %v175
    %199 = vmatmul.bf16.gmra.mxu0 %v122
    %v200 = vpop.f32.mrf.mxu0
    %v201 = vadd.f32 %v141, %v200
    %v202 = vpop.f32.mrf.mxu0
    %v203 = vadd.f32 %v141, %v202
    %204 = vdwg.mxu0
    %v205 = vmax.f32 %v201, 0.0
    %v206 = vmax.f32 %v203, 0.0
    %v207 = vpack.c.bf16 %v206, %v205
    %v208 = vld [vmem:[#allocation8] sm:$0xff]
    %v209 = vld [vmem:[#allocation8 + $0x8] sm:$0xff]
    %v210 = vld [vmem:[#allocation8 + $0x10] sm:$0xff]
    %v211 = vld [vmem:[#allocation8 + $0x18] sm:$0xff]
    %v212 = vld [vmem:[#allocation8 + $0x20] sm:$0xff]
    %v213 = vld [vmem:[#allocation8 + $0x28] sm:$0xff]
    %v214 = vld [vmem:[#allocation8 + $0x30] sm:$0xff]
    %v215 = vld [vmem:[#allocation8 + $0x38] sm:$0xff]
    %v216 = vld [vmem:[#allocation8 + $0x40] sm:$0xff]
    %v217 = vld [vmem:[#allocation8 + $0x48] sm:$0xff]
    %v218 = vld [vmem:[#allocation8 + $0x50] sm:$0xff]
    %v219 = vld [vmem:[#allocation8 + $0x58] sm:$0xff]
    %v220 = vld [vmem:[#allocation8 + $0x60] sm:$0xff]
    %v221 = vld [vmem:[#allocation8 + $0x68] sm:$0xff]
    %v222 = vld [vmem:[#allocation8 + $0x70] sm:$0xff]
    %v223 = vld [vmem:[#allocation8 + $0x78] sm:$0xff]
    %v224 = vld [vmem:[%s7] sm:$0x3]
    %v226 = vperm.slane %v224, 0
    %v227 = vperm.slane %v224, 1
    %v246 = vunpack.c.l.b16 %v208
    %v247 = vunpack.c.h.b16 %v208
    %v248 = vunpack.c.l.b16 %v209
    %v249 = vunpack.c.h.b16 %v209
    %v250 = vunpack.c.l.b16 %v210
    %v251 = vunpack.c.h.b16 %v210
    %v252 = vunpack.c.l.b16 %v211
    %v253 = vunpack.c.h.b16 %v211
    %v254 = vunpack.c.l.b16 %v212
    %v255 = vunpack.c.h.b16 %v212
    %v256 = vunpack.c.l.b16 %v213
    %v257 = vunpack.c.h.b16 %v213
    %v258 = vunpack.c.l.b16 %v214
    %v259 = vunpack.c.h.b16 %v214
    %v260 = vunpack.c.l.b16 %v215
    %v261 = vunpack.c.h.b16 %v215
    %v262 = vunpack.c.l.b16 %v216
    %v263 = vunpack.c.h.b16 %v216
    %v264 = vunpack.c.l.b16 %v217
    %v265 = vunpack.c.h.b16 %v217
    %v266 = vunpack.c.l.b16 %v218
    %v267 = vunpack.c.h.b16 %v218
    %v268 = vunpack.c.l.b16 %v219
    %v269 = vunpack.c.h.b16 %v219
    %v270 = vunpack.c.l.b16 %v220
    %v271 = vunpack.c.h.b16 %v220
    %v272 = vunpack.c.l.b16 %v221
    %v273 = vunpack.c.h.b16 %v221
    %v274 = vunpack.c.l.b16 %v222
    %v275 = vunpack.c.h.b16 %v222
    %v276 = vunpack.c.l.b16 %v223
    %v277 = vunpack.c.h.b16 %v223
    %v278 = vpack.c.b16 %v248, %v246
    %v279 = vpack.c.b16 %v249, %v247
    %v280 = vpack.c.b16 %v252, %v250
    %v281 = vpack.c.b16 %v253, %v251
    %v282 = vpack.c.b16 %v256, %v254
    %v283 = vpack.c.b16 %v257, %v255
    %v284 = vpack.c.b16 %v260, %v258
    %v285 = vpack.c.b16 %v261, %v259
    %v286 = vpack.c.b16 %v264, %v262
    %v287 = vpack.c.b16 %v265, %v263
    %v288 = vpack.c.b16 %v268, %v266
    %v289 = vpack.c.b16 %v269, %v267
    %v290 = vpack.c.b16 %v272, %v270
    %v291 = vpack.c.b16 %v273, %v271
    %v292 = vpack.c.b16 %v276, %v274
    %v293 = vpack.c.b16 %v277, %v275
    %310 = vmatpush.bf16.msra.mxu0 %v292
    %311 = vmatpush.bf16.msra.mxu0 %v290
    %312 = vmatpush.bf16.msra.mxu0 %v288
    %313 = vmatpush.bf16.msra.mxu0 %v286
    %314 = vmatpush.bf16.msra.mxu0 %v284
    %315 = vmatpush.bf16.msra.mxu0 %v282
    %316 = vmatpush.bf16.msra.mxu0 %v280
    %317 = vmatpush.bf16.msra.mxu0 %v278
    %318 = vmatmul.bf16.gmra.mxu0 %v207
    %v319 = vpop.f32.mrf.mxu0
    %v320 = vadd.f32 %v226, %v319
    %v321 = vpop.f32.mrf.mxu0
    %v322 = vadd.f32 %v226, %v321
    %323 = vdwg.mxu0
    %324 = vmatpush.bf16.msra.mxu0 %v293
    %325 = vmatpush.bf16.msra.mxu0 %v291
    %326 = vmatpush.bf16.msra.mxu0 %v289
    %327 = vmatpush.bf16.msra.mxu0 %v287
    %328 = vmatpush.bf16.msra.mxu0 %v285
    %329 = vmatpush.bf16.msra.mxu0 %v283
    %330 = vmatpush.bf16.msra.mxu0 %v281
    %331 = vmatpush.bf16.msra.mxu0 %v279
    %332 = vmatmul.bf16.gmra.mxu0 %v207
    %v333 = vpop.f32.mrf.mxu0
    %v334 = vadd.f32 %v227, %v333
    %v335 = vpop.f32.mrf.mxu0
    %v336 = vadd.f32 %v227, %v335
    %337 = vdwg.mxu0
    %v338 = vmax.f32 %v334, -20.0
    %v339 = vmax.f32 %v336, -20.0
    %v340 = vmin.f32 %v338, 2.0
    %v341 = vmin.f32 %v339, 2.0
    %v342 = vmul.f32 %v340, 1.442695
    %v343 = vpow.pop %v342
    %v344 = vmul.f32 %v341, 1.442695
    %v345 = vpow.pop %v344
    %v346 = vmul.f32 %v343, %v85
    %v347 = vmul.f32 %v345, %v86
    %v348 = vadd.f32 %v320, %v346
    %v349 = vadd.f32 %v322, %v347
    %v350 = vtanh.pop %v348
    %v351 = vtanh.pop %v349
    %v352 = vmul.f32 %v85, -0.5
    %v353 = vmul.f32 %v86, -0.5
    %v354 = vmul.f32 %v352, %v85
    %v355 = vmul.f32 %v353, %v86
    %v356 = vsub.f32 %v354, %v340
    %v357 = vsub.f32 %v355, %v341
    %v358 = vsub.f32 %v356, 0.9189385
    %v359 = vsub.f32 %v357, 0.9189385
    %v360 = vmul.f32 %v350, %v350
    %v361 = vmul.f32 %v351, %v351
    %v362 = vsub.f32 1.0, %v360
    %v363 = vsub.f32 1.0, %v361
    %v364 = vadd.f32 %v362, 1e-07
    %v365 = vadd.f32 %v363, 1e-07
    %v366 = vlog2.pop %v364
    %v367 = vmul.f32 %v366, 0.6931472
    %v368 = vlog2.pop %v365
    %v369 = vmul.f32 %v368, 0.6931472
    %v370 = vsub.f32 %v358, %v367
    %v371 = vsub.f32 %v359, %v369
    %v372 = vlaneseq
    %v373 = vand.u32 %v372, 127
    %vm374 = vcmp.lt.s32.totalorder %v373, 4
    %v375 = vsel %vm374, %v370, 0.0
    %v376 = vsel %vm374, %v371, 0.0
    %377 = vadd.xlane.f32.xlu0 %v375
    %v378 = vpop.xlane.xlu0 %377
    %379 = vadd.xlane.f32.xlu0 %v376
    %v380 = vpop.xlane.xlu0 %379
    %vm381 = vcmp.eq.s32.totalorder %v373, 4
    %v382 = vsel %vm381, %v378, %v350
    %v383 = vsel %vm381, %v380, %v351
    %384 = vst [vmem:[#allocation9] sm:$0xff] %v382
    %385 = vst [vmem:[#allocation9 + $0x8] sm:$0xff] %v383
    // Predicated region
    $region46: #{tpu_custom_call.1} parent=1 // pred_check
      _
    $region47: #{tpu_custom_call.1} parent=1 // pred_check_branch
      %387 = sbr.rel (0) target = $region49
    $region48: #{tpu_custom_call.1} parent=1 // pred_region
      %389 = vsyncadd [#allocation5], 0
      %s390 = sshll.u32 [#allocation9], 4
      %s391 = int_to_ptr.vmem [resolvable:$true] %s390
      %s392 = sshll.u32 %s8, 4
      %s393 = int_to_ptr.hbm [resolvable:$true] %s392
      %398 = dma.vmem_to_hbm [thread:$0]  %s391, 256, %s393, [#allocation5], 128, 128, 8
    $region49: #{tpu_custom_call.1} parent=1 // pred_fallthru
      _
    // Predicated region
    $region50: #{tpu_custom_call.1} parent=1 // pred_check
      _
    $region51: #{tpu_custom_call.1} parent=1 // pred_check_branch
      %400 = sbr.rel (0) target = $region53
    $region52: #{tpu_custom_call.1} parent=1 // pred_region
      %402 = dma.done [#allocation5], 256
    $region53: #{tpu_custom_call.1} parent=1 // pred_fallthru
      _
    %403 = vsyncpa [#allocation4], 1
    %404 = vsyncpa [#allocation7], 1
    %405 = vsyncpa [#allocation5], 1

</llo_original>
